<compile_context>
chip_gen: v7x
topology: tpu7x:2x2x1
jax: 0.10.0
libtpu: 0.0.40
codegen_flags: <defaults>
</compile_context>

<pallas_src>
import functools

import jax
import jax.numpy as jnp
from jax.experimental import pallas as pl
from jax.experimental.pallas import tpu as pltpu

EPS = 1e-5
LANE = 128
SUB = 8


def _round_up(v, m):
    return (v + m - 1) // m * m


def _vmem_capacity_bytes():
    try:
        return int(pltpu.get_tpu_info().vmem_capacity_bytes)
    except Exception:
        return 64 * 1024 * 1024          # conservative (v7x per-TC) fallback


def mlp_kernel(x_hbm, w0_ref, w12_ref, wo_ref, vec_ref, o_ref,
               xbuf, copy_sem, z0_ref, sum_ref, ssq_ref, *,
               n_extra, n_chunks, chunk, inv_n):
    """Fused MLP forward.

    x_hbm   : (n_chunks, chunk, F_pad) bf16   -- HBM, streamed in manually
    w0_ref  : (F_pad, H_pad)           bf16
    w12_ref : (2, H_pad, H_pad)        bf16
    wo_ref  : (H_pad, LANE)            bf16   (real head weight in column 0)
    vec_ref : (10, H_pad)              f32    rows: [b0,g0,be0, b1,g1,be1, b2,g2,be2, bo]
    o_ref   : (N_pad, LANE)            f32    (real output in column 0)
    xbuf    : (2, chunk, F_pad)        bf16   VMEM double buffer
    copy_sem: DMA semaphores (2,)
    z0_ref  : (N_pad, H_pad)           f32    layer-0 activations
    sum_ref, ssq_ref : (1, H_pad)      f32    layer-0 stat accumulators
    """
    h_pad = z0_ref.shape[1]
    n_ex = jnp.float32(n_extra)
    inv_n = jnp.float32(inv_n)

    def vrow(r):                                   # (1, H_pad) static ref slice
        return vec_ref[r:r + 1, :]

    def fetch(c, slot):
        return pltpu.make_async_copy(x_hbm.at[c], xbuf.at[slot], copy_sem.at[slot])

    # ---------- layer 0: stream x chunks from HBM, overlap DMA with the matmul ----
    fetch(0, 0).start()
    sum_ref[...] = jnp.zeros_like(sum_ref)
    ssq_ref[...] = jnp.zeros_like(ssq_ref)

    @pl.loop(0, n_chunks)
    def _(c):
        slot = c & 1
        fetch(c, slot).wait()

        @pl.when(c + 1 < n_chunks)
        def _():
            fetch(c + 1, 1 - slot).start()         # prefetch next chunk

        z = jnp.dot(xbuf[slot], w0_ref[...], preferred_element_type=jnp.float32)
        z = jnp.maximum(z + vrow(0), jnp.float32(0.0))
        row0 = pl.multiple_of(c * chunk, chunk)
        z0_ref[pl.ds(row0, chunk), :] = z
        sum_ref[...] += jnp.sum(z, axis=0, keepdims=True)
        ssq_ref[...] += jnp.sum(z * z, axis=0, keepdims=True)

    def stats_to_scale_shift(s, q, g_row, b_row):
        # One-pass stats folded into a per-feature affine:  zhat*g+b == z*scale+shift
        mean = s * inv_n
        var = q * inv_n - mean * mean
        scale = g_row * jax.lax.rsqrt(var + jnp.float32(EPS))   # EUP rsqrt on (1,H)
        shift = b_row - mean * scale
        return scale, shift

    # Zero-padded batch rows all produce the same "phantom" row through every layer;
    # subtract its (bitwise-identical) contribution so stats use only the real rows.
    ph_z = jnp.maximum(vrow(0), jnp.float32(0.0))          # relu(0 @ W0 + b0)
    s0 = sum_ref[...] - n_ex * ph_z
    q0 = ssq_ref[...] - n_ex * ph_z * ph_z
    scale, shift = stats_to_scale_shift(s0, q0, vrow(1), vrow(2))
    h = z0_ref[...] * scale + shift                        # (N_pad, H_pad) f32
    ph = ph_z * scale + shift                              # (1, H_pad)

    # ---------- layers 1 & 2: full batch resident in VMEM --------------------------
    def hidden(h, ph, w_bf16, r):
        z = jnp.dot(h.astype(jnp.bfloat16), w_bf16, preferred_element_type=jnp.float32)
        z = jnp.maximum(z + vrow(r), jnp.float32(0.0))
        # Phantom row through the same linear+ReLU (tiny 8-row matmul).
        ph8 = jnp.broadcast_to(ph, (8, h_pad)).astype(jnp.bfloat16)
        pz = jnp.dot(ph8, w_bf16, preferred_element_type=jnp.float32)[0:1, :]
        pz = jnp.maximum(pz + vrow(r), jnp.float32(0.0))
        s = jnp.sum(z, axis=0, keepdims=True) - n_ex * pz
        q = jnp.sum(z * z, axis=0, keepdims=True) - n_ex * pz * pz
        scale, shift = stats_to_scale_shift(s, q, vrow(r + 1), vrow(r + 2))
        return z * scale + shift, pz * scale + shift

    h, ph = hidden(h, ph, w12_ref[0], 3)
    h, ph = hidden(h, ph, w12_ref[1], 6)

    # ---------- output head: lane-dense (N_pad, 128) f32 slab, result in column 0 --
    o_ref[...] = jnp.dot(h.astype(jnp.bfloat16), wo_ref[...],
                         preferred_element_type=jnp.float32) \
        + vec_ref[9:10, 0:o_ref.shape[1]]


def mlp_forward(x, params, *, chunk_rows=512):
    (w0, b0, g0, be0, w1, b1, g1, be1, w2, b2, g2, be2, wo, bo) = params
    n, f = x.shape
    h_dim = w0.shape[1]
    f_pad = _round_up(f, LANE)
    h_pad = _round_up(h_dim, LANE)

    # Chunking of the streamed batch dimension.
    chunk = _round_up(min(chunk_rows, n), SUB)
    n_pad = _round_up(n, chunk)
    n_chunks = n_pad // chunk
    n_extra = n_pad - n

    def pad2(a, rows, cols):
        a = jnp.asarray(a, jnp.float32)
        return jnp.pad(a, ((0, rows - a.shape[0]), (0, cols - a.shape[1])))

    def pad_row(v, cols):
        v = jnp.asarray(v, jnp.float32).reshape(1, -1)
        return jnp.pad(v, ((0, 0), (0, cols - v.shape[1])))

    # Pad to lane-aligned shapes; bf16 for everything the MXU consumes (halves DMA).
    x_p = pad2(x, n_pad, f_pad).astype(jnp.bfloat16).reshape(n_chunks, chunk, f_pad)
    w0_p = pad2(w0, f_pad, h_pad).astype(jnp.bfloat16)
    w12_p = jnp.stack([pad2(w1, h_pad, h_pad),
                       pad2(w2, h_pad, h_pad)]).astype(jnp.bfloat16)
    wo_p = pad2(wo, h_pad, LANE).astype(jnp.bfloat16)
    vecs = jnp.concatenate(
        [pad_row(b0, h_pad), pad_row(g0, h_pad), pad_row(be0, h_pad),
         pad_row(b1, h_pad), pad_row(g1, h_pad), pad_row(be1, h_pad),
         pad_row(b2, h_pad), pad_row(g2, h_pad), pad_row(be2, h_pad),
         pad_row(bo, h_pad)], axis=0)

    def nbytes(a):
        return a.size * a.dtype.itemsize

    weight_bytes = nbytes(w0_p) + nbytes(w12_p) + nbytes(wo_p) + nbytes(vecs)
    out_bytes = n_pad * LANE * 4
    io_bytes = nbytes(x_p) + weight_bytes + out_bytes
    resident = (weight_bytes
                + 2 * chunk * f_pad * 2            # streamed-x double buffer (bf16)
                + n_pad * h_pad * 4                # layer-0 activation scratch
                + out_bytes                        # output slab
                + 3 * n_pad * h_pad * 4)           # live f32/bf16 temporaries headroom

    vmem_cap = _vmem_capacity_bytes()
    vmem_budget = int(vmem_cap * 0.6)              # headroom for compiler scratch
    assert resident < vmem_budget, (
        f"resident set {resident} B exceeds VMEM budget {vmem_budget} B; "
        "use a batch-tiled two-phase variant")
    vmem_limit = int(min(max(resident * 3 // 2, 32 * 1024 * 1024), vmem_cap * 3 // 4))

    cost = pl.CostEstimate(
        flops=2 * n_pad * (f_pad * h_pad + 2 * h_pad * h_pad + h_pad * LANE),
        transcendentals=3 * h_pad,
        bytes_accessed=io_bytes)

    kernel = functools.partial(mlp_kernel, n_extra=n_extra, n_chunks=n_chunks,
                               chunk=chunk, inv_n=1.0 / n)
    vmem_spec = pl.BlockSpec(memory_space=pltpu.MemorySpace.VMEM)
    out = pl.pallas_call(
        kernel,
        out_shape=jax.ShapeDtypeStruct((n_pad, LANE), jnp.float32),
        in_specs=[pl.BlockSpec(memory_space=pl.ANY),   # x stays in HBM, streamed
                  vmem_spec, vmem_spec, vmem_spec, vmem_spec],
        out_specs=vmem_spec,
        scratch_shapes=[
            pltpu.VMEM((2, chunk, f_pad), jnp.bfloat16),   # x double buffer
            pltpu.SemaphoreType.DMA((2,)),                 # copy semaphores
            pltpu.VMEM((n_pad, h_pad), jnp.float32),       # layer-0 activations
            pltpu.VMEM((1, h_pad), jnp.float32),           # sum(z0)
            pltpu.VMEM((1, h_pad), jnp.float32),           # sum(z0*z0)
        ],
        compiler_params=pltpu.CompilerParams(vmem_limit_bytes=vmem_limit),
        cost_estimate=cost,
    )(x_p, w0_p, w12_p, wo_p, vecs)

    # Column 0 of the lane-dense slab holds the real head output; torch .squeeze()
    # removes all size-1 dims.
    return jnp.squeeze(out[:n, 0])


def init_params(key, num_features, h_dim):
    """Deterministic init mimicking nn.Linear's U(-1/sqrt(fan_in), 1/sqrt(fan_in))."""
    def linear(k, fan_in, fan_out):
        kw, kb = jax.random.split(k)
        bound = 1.0 / jnp.sqrt(jnp.float32(fan_in))
        w = jax.random.uniform(kw, (fan_in, fan_out), jnp.float32, -bound, bound)
        b = jax.random.uniform(kb, (1, fan_out), jnp.float32, -bound, bound)
        return w, b

    k0, k1, k2, ko = jax.random.split(key, 4)
    w0, b0 = linear(k0, num_features, h_dim)
    w1, b1 = linear(k1, h_dim, h_dim)
    w2, b2 = linear(k2, h_dim, h_dim)
    wo, bo = linear(ko, h_dim, 1)

    gamma = jnp.ones((1, h_dim), jnp.float32)   # BatchNorm1d affine defaults
    beta = jnp.zeros((1, h_dim), jnp.float32)

    return [w0, b0, gamma, beta,
            w1, b1, gamma, beta,
            w2, b2, gamma, beta,
            wo, bo]


def mlp_reference(x, params):
    """Pure-JAX reference (bf16 matmul operands, f32 math, two-pass batch stats)."""
    (w0, b0, g0, be0, w1, b1, g1, be1, w2, b2, g2, be2, wo, bo) = params

    def block(h, w, b, g, be):
        z = jnp.dot(h.astype(jnp.bfloat16), w.astype(jnp.bfloat16),
                    preferred_element_type=jnp.float32) + b
        z = jnp.maximum(z, 0.0)
        mean = jnp.mean(z, axis=0, keepdims=True)
        var = jnp.mean((z - mean) ** 2, axis=0, keepdims=True)
        return (z - mean) / jnp.sqrt(var + EPS) * g + be

    h = block(x, w0, b0, g0, be0)
    h = block(h, w1, b1, g1, be1)
    h = block(h, w2, b2, g2, be2)
    out = jnp.dot(h.astype(jnp.bfloat16), wo.astype(jnp.bfloat16),
                  preferred_element_type=jnp.float32) + bo
    return jnp.squeeze(out)


if __name__ == "__main__":
    key = jax.random.PRNGKey(0)
    k1x, k1p, k2x, k2p = jax.random.split(key, 4)

    # --- small demo shapes (single streamed chunk, no batch padding) -------------
    batch, num_features, h_dim = 8, 16, 32
    x = jax.random.normal(k1x, (batch, num_features), jnp.float32)
    params = init_params(k1p, num_features, h_dim)
    out = jax.block_until_ready(mlp_forward(x, params))
    ref = jax.block_until_ready(mlp_reference(x, params))
    assert out.shape == (batch,), out.shape
    assert jnp.allclose(out, ref, atol=1e-3, rtol=1e-3), (out, ref)

    # --- multi-chunk streaming + padded-batch stat correction --------------------
    batch2, num_features2, h_dim2 = 200, 48, 96
    x2 = jax.random.normal(k2x, (batch2, num_features2), jnp.float32)
    params2 = init_params(k2p, num_features2, h_dim2)
    out2 = jax.block_until_ready(mlp_forward(x2, params2, chunk_rows=64))
    ref2 = jax.block_until_ready(mlp_reference(x2, params2))
    assert out2.shape == (batch2,), out2.shape
    assert jnp.allclose(out2, ref2, atol=2e-3, rtol=2e-3), (
        float(jnp.max(jnp.abs(out2 - ref2))))

    print("KERNEL_OK")
</pallas_src>

<mosaic_0001>
module attributes {stable_mosaic.version = 11 : i64} {
  func.func @mlp_kernel(%arg0: memref<1x8x128xbf16, #tpu.memory_space<any>>, %arg1: memref<128x128xbf16, #tpu.memory_space<vmem>>, %arg2: memref<2x128x128xbf16, #tpu.memory_space<vmem>>, %arg3: memref<128x128xbf16, #tpu.memory_space<vmem>>, %arg4: memref<10x128xf32, #tpu.memory_space<vmem>>, %arg5: memref<8x128xf32, #tpu.memory_space<vmem>>, %arg6: memref<2x8x128xbf16, #tpu.memory_space<vmem>>, %arg7: memref<2x!tpu.dma_semaphore, #tpu.memory_space<semaphore_mem>>, %arg8: memref<8x128xf32, #tpu.memory_space<vmem>>, %arg9: memref<1x128xf32, #tpu.memory_space<vmem>>, %arg10: memref<1x128xf32, #tpu.memory_space<vmem>>) attributes {dimension_semantics = [], scalar_prefetch = 0 : i64, scratch_operands = 5 : i64, tpu.core_type = #tpu.core_type<tc>} {
    %c0_i32 = arith.constant 0 : i32
    %c0_i32_0 = arith.constant 0 : i32
    %c0_i32_1 = arith.constant 0 : i32
    %c0_i32_2 = arith.constant 0 : i32
    %c0_i32_3 = arith.constant 0 : i32
    %0 = tpu.memref_slice %arg0[%c0_i32, %c0_i32_2, %c0_i32_3] : memref<1x8x128xbf16, #tpu.memory_space<any>> -> memref<1x8x128xbf16, #tpu.memory_space<any>>
    %1 = tpu.memref_squeeze %0 : memref<1x8x128xbf16, #tpu.memory_space<any>> -> memref<8x128xbf16, #tpu.memory_space<any>>
    %c0_i32_4 = arith.constant 0 : i32
    %c0_i32_5 = arith.constant 0 : i32
    %2 = tpu.memref_slice %arg6[%c0_i32_0, %c0_i32_4, %c0_i32_5] : memref<2x8x128xbf16, #tpu.memory_space<vmem>> -> memref<1x8x128xbf16, #tpu.memory_space<vmem>>
    %3 = tpu.memref_squeeze %2 : memref<1x8x128xbf16, #tpu.memory_space<vmem>> -> memref<8x128xbf16, #tpu.memory_space<vmem>>
    %4 = tpu.memref_slice %arg7[%c0_i32_1] : memref<2x!tpu.dma_semaphore, #tpu.memory_space<semaphore_mem>> -> memref<1x!tpu.dma_semaphore, #tpu.memory_space<semaphore_mem>>
    %5 = tpu.memref_squeeze %4 : memref<1x!tpu.dma_semaphore, #tpu.memory_space<semaphore_mem>> -> memref<!tpu.dma_semaphore, #tpu.memory_space<semaphore_mem>>
    tpu.enqueue_dma source(%1 : memref<8x128xbf16, #tpu.memory_space<any>>) target(%3 : memref<8x128xbf16, #tpu.memory_space<vmem>>) target_semaphore(%5 : memref<!tpu.dma_semaphore, #tpu.memory_space<semaphore_mem>>)
    %cst = arith.constant 0.000000e+00 : f32
    %6 = vector.broadcast %cst : f32 to vector<1x128xf32>
    %c0 = arith.constant 0 : index
    %c0_6 = arith.constant 0 : index
    %7 = vector.load %arg9[%c0, %c0_6] : memref<1x128xf32, #tpu.memory_space<vmem>>, vector<1x128xf32>
    tpu.vector_store %arg9[%c0, %c0_6], %6 {strides = array<i32>} : memref<1x128xf32, #tpu.memory_space<vmem>>, vector<1x128xf32>,
    %cst_7 = arith.constant 0.000000e+00 : f32
    %8 = vector.broadcast %cst_7 : f32 to vector<1x128xf32>
    %c0_8 = arith.constant 0 : index
    %c0_9 = arith.constant 0 : index
    %9 = vector.load %arg10[%c0_8, %c0_9] : memref<1x128xf32, #tpu.memory_space<vmem>>, vector<1x128xf32>
    tpu.vector_store %arg10[%c0_8, %c0_9], %8 {strides = array<i32>} : memref<1x128xf32, #tpu.memory_space<vmem>>, vector<1x128xf32>,
    %c0_i32_10 = arith.constant 0 : i32
    %c1_i32 = arith.constant 1 : i32
    %10 = arith.muli %c0_i32_10, %c1_i32 : i32
    %c0_i32_11 = arith.constant 0 : i32
    %11 = arith.addi %c0_i32_11, %10 : i32
    %c1_i32_12 = arith.constant 1 : i32
    %12 = arith.andi %11, %c1_i32_12 : i32
    %c0_i32_13 = arith.constant 0 : i32
    %c0_i32_14 = arith.constant 0 : i32
    %13 = tpu.memref_slice %arg0[%11, %c0_i32_13, %c0_i32_14] : memref<1x8x128xbf16, #tpu.memory_space<any>> -> memref<1x8x128xbf16, #tpu.memory_space<any>>
    %14 = tpu.memref_squeeze %13 : memref<1x8x128xbf16, #tpu.memory_space<any>> -> memref<8x128xbf16, #tpu.memory_space<any>>
    %c0_i32_15 = arith.constant 0 : i32
    %c0_i32_16 = arith.constant 0 : i32
    %15 = tpu.memref_slice %arg6[%12, %c0_i32_15, %c0_i32_16] : memref<2x8x128xbf16, #tpu.memory_space<vmem>> -> memref<1x8x128xbf16, #tpu.memory_space<vmem>>
    %16 = tpu.memref_squeeze %15 : memref<1x8x128xbf16, #tpu.memory_space<vmem>> -> memref<8x128xbf16, #tpu.memory_space<vmem>>
    %17 = tpu.memref_slice %arg7[%12] : memref<2x!tpu.dma_semaphore, #tpu.memory_space<semaphore_mem>> -> memref<1x!tpu.dma_semaphore, #tpu.memory_space<semaphore_mem>>
    %18 = tpu.memref_squeeze %17 : memref<1x!tpu.dma_semaphore, #tpu.memory_space<semaphore_mem>> -> memref<!tpu.dma_semaphore, #tpu.memory_space<semaphore_mem>>
    tpu.wait_dma2 semaphore(%18 : memref<!tpu.dma_semaphore, #tpu.memory_space<semaphore_mem>>) src(%14 : memref<8x128xbf16, #tpu.memory_space<any>>) dst(%16 : memref<8x128xbf16, #tpu.memory_space<vmem>>)
    %c1_i32_17 = arith.constant 1 : i32
    %19 = arith.addi %11, %c1_i32_17 : i32
    %c1_i32_18 = arith.constant 1 : i32
    %20 = arith.cmpi slt, %19, %c1_i32_18 : i32
    %21 = arith.extui %20 : i1 to i32
    %c0_i32_19 = arith.constant 0 : i32
    %22 = arith.cmpi ne, %21, %c0_i32_19 : i32
    scf.if %22 {
      %c1_i32_100 = arith.constant 1 : i32
      %186 = arith.addi %11, %c1_i32_100 : i32
      %c1_i32_101 = arith.constant 1 : i32
      %187 = arith.subi %c1_i32_101, %12 : i32
      %c0_i32_102 = arith.constant 0 : i32
      %c0_i32_103 = arith.constant 0 : i32
      %188 = tpu.memref_slice %arg0[%186, %c0_i32_102, %c0_i32_103] : memref<1x8x128xbf16, #tpu.memory_space<any>> -> memref<1x8x128xbf16, #tpu.memory_space<any>>
      %189 = tpu.memref_squeeze %188 : memref<1x8x128xbf16, #tpu.memory_space<any>> -> memref<8x128xbf16, #tpu.memory_space<any>>
      %c0_i32_104 = arith.constant 0 : i32
      %c0_i32_105 = arith.constant 0 : i32
      %190 = tpu.memref_slice %arg6[%187, %c0_i32_104, %c0_i32_105] : memref<2x8x128xbf16, #tpu.memory_space<vmem>> -> memref<1x8x128xbf16, #tpu.memory_space<vmem>>
      %191 = tpu.memref_squeeze %190 : memref<1x8x128xbf16, #tpu.memory_space<vmem>> -> memref<8x128xbf16, #tpu.memory_space<vmem>>
      %192 = tpu.memref_slice %arg7[%187] : memref<2x!tpu.dma_semaphore, #tpu.memory_space<semaphore_mem>> -> memref<1x!tpu.dma_semaphore, #tpu.memory_space<semaphore_mem>>
      %193 = tpu.memref_squeeze %192 : memref<1x!tpu.dma_semaphore, #tpu.memory_space<semaphore_mem>> -> memref<!tpu.dma_semaphore, #tpu.memory_space<semaphore_mem>>
      tpu.enqueue_dma source(%189 : memref<8x128xbf16, #tpu.memory_space<any>>) target(%191 : memref<8x128xbf16, #tpu.memory_space<vmem>>) target_semaphore(%193 : memref<!tpu.dma_semaphore, #tpu.memory_space<semaphore_mem>>)
    } else {
    }
    %23 = arith.index_cast %12 : i32 to index
    %c0_20 = arith.constant 0 : index
    %c0_21 = arith.constant 0 : index
    %24 = vector.load %arg6[%23, %c0_20, %c0_21] : memref<2x8x128xbf16, #tpu.memory_space<vmem>>, vector<1x8x128xbf16>
    %25 = vector.shape_cast %24 : vector<1x8x128xbf16> to vector<8x128xbf16>
    %c0_22 = arith.constant 0 : index
    %c0_23 = arith.constant 0 : index
    %26 = vector.load %arg1[%c0_22, %c0_23] : memref<128x128xbf16, #tpu.memory_space<vmem>>, vector<128x128xbf16>
    %cst_24 = arith.constant dense<0.000000e+00> : vector<8x128xf32>
    %27 = tpu.matmul %25, %26, %cst_24 {dimension_numbers = #tpu.dot_dimension_numbers<[1], [0], [0], [1], [0, 0, 1, 1], [], []>} : vector<8x128xbf16>, vector<128x128xbf16>, vector<8x128xf32> -> vector<8x128xf32>
    %c0_25 = arith.constant 0 : index
    %c0_26 = arith.constant 0 : index
    %28 = vector.load %arg4[%c0_25, %c0_26] : memref<10x128xf32, #tpu.memory_space<vmem>>, vector<1x128xf32>
    %29 = vector.broadcast %28 : vector<1x128xf32> to vector<8x128xf32>
    %30 = arith.addf %27, %29 : vector<8x128xf32>
    %cst_27 = arith.constant 0.000000e+00 : f32
    %31 = vector.broadcast %cst_27 : f32 to vector<8x128xf32>
    %32 = arith.maximumf %30, %31 : vector<8x128xf32>
    %c8_i32 = arith.constant 8 : i32
    %33 = arith.muli %11, %c8_i32 : i32
    %34 = tpu.assume_multiple %33, 8 : i32
    %35 = arith.index_cast %34 : i32 to index
    %c0_28 = arith.constant 0 : index
    %36 = vector.load %arg8[%35, %c0_28] : memref<8x128xf32, #tpu.memory_space<vmem>>, vector<8x128xf32>
    tpu.vector_store %arg8[%35, %c0_28], %32 {strides = array<i32>} : memref<8x128xf32, #tpu.memory_space<vmem>>, vector<8x128xf32>,
    %c0_29 = arith.constant 0 : index
    %c0_30 = arith.constant 0 : index
    %37 = vector.load %arg9[%c0_29, %c0_30] : memref<1x128xf32, #tpu.memory_space<vmem>>, vector<1x128xf32>
    %cst_31 = arith.constant dense<0.000000e+00> : vector<128xf32>
    %38 = vector.multi_reduction <add>, %32, %cst_31 [0] : vector<8x128xf32> to vector<128xf32>
    %39 = vector.shape_cast %38 : vector<128xf32> to vector<1x128xf32>
    %40 = arith.addf %37, %39 : vector<1x128xf32>
    %c0_32 = arith.constant 0 : index
    %c0_33 = arith.constant 0 : index
    %41 = vector.load %arg9[%c0_32, %c0_33] : memref<1x128xf32, #tpu.memory_space<vmem>>, vector<1x128xf32>
    tpu.vector_store %arg9[%c0_32, %c0_33], %40 {strides = array<i32>} : memref<1x128xf32, #tpu.memory_space<vmem>>, vector<1x128xf32>,
    %c0_34 = arith.constant 0 : index
    %c0_35 = arith.constant 0 : index
    %42 = vector.load %arg10[%c0_34, %c0_35] : memref<1x128xf32, #tpu.memory_space<vmem>>, vector<1x128xf32>
    %43 = arith.mulf %32, %32 : vector<8x128xf32>
    %cst_36 = arith.constant dense<0.000000e+00> : vector<128xf32>
    %44 = vector.multi_reduction <add>, %43, %cst_36 [0] : vector<8x128xf32> to vector<128xf32>
    %45 = vector.shape_cast %44 : vector<128xf32> to vector<1x128xf32>
    %46 = arith.addf %42, %45 : vector<1x128xf32>
    %c0_37 = arith.constant 0 : index
    %c0_38 = arith.constant 0 : index
    %47 = vector.load %arg10[%c0_37, %c0_38] : memref<1x128xf32, #tpu.memory_space<vmem>>, vector<1x128xf32>
    tpu.vector_store %arg10[%c0_37, %c0_38], %46 {strides = array<i32>} : memref<1x128xf32, #tpu.memory_space<vmem>>, vector<1x128xf32>,
    %c1_i32_39 = arith.constant 1 : i32
    %c0_40 = arith.constant 0 : index
    %c0_41 = arith.constant 0 : index
    %48 = vector.load %arg4[%c0_40, %c0_41] : memref<10x128xf32, #tpu.memory_space<vmem>>, vector<1x128xf32>
    %cst_42 = arith.constant 0.000000e+00 : f32
    %49 = vector.broadcast %cst_42 : f32 to vector<1x128xf32>
    %50 = arith.maximumf %48, %49 : vector<1x128xf32>
    %c0_43 = arith.constant 0 : index
    %c0_44 = arith.constant 0 : index
    %51 = vector.load %arg9[%c0_43, %c0_44] : memref<1x128xf32, #tpu.memory_space<vmem>>, vector<1x128xf32>
    %cst_45 = arith.constant 0.000000e+00 : f32
    %52 = vector.broadcast %cst_45 : f32 to vector<1x128xf32>
    %53 = arith.mulf %52, %50 : vector<1x128xf32>
    %54 = arith.subf %51, %53 : vector<1x128xf32>
    %c0_46 = arith.constant 0 : index
    %c0_47 = arith.constant 0 : index
    %55 = vector.load %arg10[%c0_46, %c0_47] : memref<1x128xf32, #tpu.memory_space<vmem>>, vector<1x128xf32>
    %cst_48 = arith.constant 0.000000e+00 : f32
    %56 = vector.broadcast %cst_48 : f32 to vector<1x128xf32>
    %57 = arith.mulf %56, %50 : vector<1x128xf32>
    %58 = arith.mulf %57, %50 : vector<1x128xf32>
    %59 = arith.subf %55, %58 : vector<1x128xf32>
    %c1 = arith.constant 1 : index
    %c0_49 = arith.constant 0 : index
    %60 = vector.load %arg4[%c1, %c0_49] : memref<10x128xf32, #tpu.memory_space<vmem>>, vector<1x128xf32>
    %c2 = arith.constant 2 : index
    %c0_50 = arith.constant 0 : index
    %61 = vector.load %arg4[%c2, %c0_50] : memref<10x128xf32, #tpu.memory_space<vmem>>, vector<1x128xf32>
    %cst_51 = arith.constant 1.250000e-01 : f32
    %62 = vector.broadcast %cst_51 : f32 to vector<1x128xf32>
    %63 = arith.mulf %54, %62 : vector<1x128xf32>
    %cst_52 = arith.constant 1.250000e-01 : f32
    %64 = vector.broadcast %cst_52 : f32 to vector<1x128xf32>
    %65 = arith.mulf %59, %64 : vector<1x128xf32>
    %66 = arith.mulf %63, %63 : vector<1x128xf32>
    %67 = arith.subf %65, %66 : vector<1x128xf32>
    %cst_53 = arith.constant 9.99999974E-6 : f32
    %68 = vector.broadcast %cst_53 : f32 to vector<1x128xf32>
    %69 = arith.addf %67, %68 : vector<1x128xf32>
    %70 = math.rsqrt %69 : vector<1x128xf32>
    %71 = arith.mulf %60, %70 : vector<1x128xf32>
    %72 = arith.mulf %63, %71 : vector<1x128xf32>
    %73 = arith.subf %61, %72 : vector<1x128xf32>
    %c0_54 = arith.constant 0 : index
    %c0_55 = arith.constant 0 : index
    %74 = vector.load %arg8[%c0_54, %c0_55] : memref<8x128xf32, #tpu.memory_space<vmem>>, vector<8x128xf32>
    %75 = vector.broadcast %71 : vector<1x128xf32> to vector<8x128xf32>
    %76 = arith.mulf %74, %75 : vector<8x128xf32>
    %77 = vector.broadcast %73 : vector<1x128xf32> to vector<8x128xf32>
    %78 = arith.addf %76, %77 : vector<8x128xf32>
    %79 = arith.mulf %50, %71 : vector<1x128xf32>
    %80 = arith.addf %79, %73 : vector<1x128xf32>
    %c0_56 = arith.constant 0 : index
    %c0_57 = arith.constant 0 : index
    %c0_58 = arith.constant 0 : index
    %81 = vector.load %arg2[%c0_56, %c0_57, %c0_58] : memref<2x128x128xbf16, #tpu.memory_space<vmem>>, vector<1x128x128xbf16>
    %82 = vector.shape_cast %81 : vector<1x128x128xbf16> to vector<128x128xbf16>
    %83 = arith.truncf %78 : vector<8x128xf32> to vector<8x128xbf16>
    %cst_59 = arith.constant dense<0.000000e+00> : vector<8x128xf32>
    %84 = tpu.matmul %83, %82, %cst_59 {dimension_numbers = #tpu.dot_dimension_numbers<[1], [0], [0], [1], [0, 0, 1, 1], [], []>} : vector<8x128xbf16>, vector<128x128xbf16>, vector<8x128xf32> -> vector<8x128xf32>
    %c3 = arith.constant 3 : index
    %c0_60 = arith.constant 0 : index
    %85 = vector.load %arg4[%c3, %c0_60] : memref<10x128xf32, #tpu.memory_space<vmem>>, vector<1x128xf32>
    %86 = vector.broadcast %85 : vector<1x128xf32> to vector<8x128xf32>
    %87 = arith.addf %84, %86 : vector<8x128xf32>
    %cst_61 = arith.constant 0.000000e+00 : f32
    %88 = vector.broadcast %cst_61 : f32 to vector<8x128xf32>
    %89 = arith.maximumf %87, %88 : vector<8x128xf32>
    %90 = vector.shape_cast %80 : vector<1x128xf32> to vector<1x128xf32>
    %91 = vector.broadcast %90 : vector<1x128xf32> to vector<8x128xf32>
    %92 = arith.truncf %91 : vector<8x128xf32> to vector<8x128xbf16>
    %cst_62 = arith.constant dense<0.000000e+00> : vector<8x128xf32>
    %93 = tpu.matmul %92, %82, %cst_62 {dimension_numbers = #tpu.dot_dimension_numbers<[1], [0], [0], [1], [0, 0, 1, 1], [], []>} : vector<8x128xbf16>, vector<128x128xbf16>, vector<8x128xf32> -> vector<8x128xf32>
    %94 = vector.extract_strided_slice %93 {offsets = [0, 0], sizes = [1, 128], strides = [1, 1]} : vector<8x128xf32> to vector<1x128xf32>
    %c3_63 = arith.constant 3 : index
    %c0_64 = arith.constant 0 : index
    %95 = vector.load %arg4[%c3_63, %c0_64] : memref<10x128xf32, #tpu.memory_space<vmem>>, vector<1x128xf32>
    %96 = arith.addf %94, %95 : vector<1x128xf32>
    %cst_65 = arith.constant 0.000000e+00 : f32
    %97 = vector.broadcast %cst_65 : f32 to vector<1x128xf32>
    %98 = arith.maximumf %96, %97 : vector<1x128xf32>
    %cst_66 = arith.constant dense<0.000000e+00> : vector<128xf32>
    %99 = vector.multi_reduction <add>, %89, %cst_66 [0] : vector<8x128xf32> to vector<128xf32>
    %100 = vector.shape_cast %99 : vector<128xf32> to vector<1x128xf32>
    %cst_67 = arith.constant 0.000000e+00 : f32
    %101 = vector.broadcast %cst_67 : f32 to vector<1x128xf32>
    %102 = arith.mulf %101, %98 : vector<1x128xf32>
    %103 = arith.subf %100, %102 : vector<1x128xf32>
    %104 = arith.mulf %89, %89 : vector<8x128xf32>
    %cst_68 = arith.constant dense<0.000000e+00> : vector<128xf32>
    %105 = vector.multi_reduction <add>, %104, %cst_68 [0] : vector<8x128xf32> to vector<128xf32>
    %106 = vector.shape_cast %105 : vector<128xf32> to vector<1x128xf32>
    %cst_69 = arith.constant 0.000000e+00 : f32
    %107 = vector.broadcast %cst_69 : f32 to vector<1x128xf32>
    %108 = arith.mulf %107, %98 : vector<1x128xf32>
    %109 = arith.mulf %108, %98 : vector<1x128xf32>
    %110 = arith.subf %106, %109 : vector<1x128xf32>
    %c4 = arith.constant 4 : index
    %c0_70 = arith.constant 0 : index
    %111 = vector.load %arg4[%c4, %c0_70] : memref<10x128xf32, #tpu.memory_space<vmem>>, vector<1x128xf32>
    %c5 = arith.constant 5 : index
    %c0_71 = arith.constant 0 : index
    %112 = vector.load %arg4[%c5, %c0_71] : memref<10x128xf32, #tpu.memory_space<vmem>>, vector<1x128xf32>
    %cst_72 = arith.constant 1.250000e-01 : f32
    %113 = vector.broadcast %cst_72 : f32 to vector<1x128xf32>
    %114 = arith.mulf %103, %113 : vector<1x128xf32>
    %cst_73 = arith.constant 1.250000e-01 : f32
    %115 = vector.broadcast %cst_73 : f32 to vector<1x128xf32>
    %116 = arith.mulf %110, %115 : vector<1x128xf32>
    %117 = arith.mulf %114, %114 : vector<1x128xf32>
    %118 = arith.subf %116, %117 : vector<1x128xf32>
    %cst_74 = arith.constant 9.99999974E-6 : f32
    %119 = vector.broadcast %cst_74 : f32 to vector<1x128xf32>
    %120 = arith.addf %118, %119 : vector<1x128xf32>
    %121 = math.rsqrt %120 : vector<1x128xf32>
    %122 = arith.mulf %111, %121 : vector<1x128xf32>
    %123 = arith.mulf %114, %122 : vector<1x128xf32>
    %124 = arith.subf %112, %123 : vector<1x128xf32>
    %125 = vector.broadcast %122 : vector<1x128xf32> to vector<8x128xf32>
    %126 = arith.mulf %89, %125 : vector<8x128xf32>
    %127 = vector.broadcast %124 : vector<1x128xf32> to vector<8x128xf32>
    %128 = arith.addf %126, %127 : vector<8x128xf32>
    %129 = arith.mulf %98, %122 : vector<1x128xf32>
    %130 = arith.addf %129, %124 : vector<1x128xf32>
    %c1_75 = arith.constant 1 : index
    %c0_76 = arith.constant 0 : index
    %c0_77 = arith.constant 0 : index
    %131 = vector.load %arg2[%c1_75, %c0_76, %c0_77] : memref<2x128x128xbf16, #tpu.memory_space<vmem>>, vector<1x128x128xbf16>
    %132 = vector.shape_cast %131 : vector<1x128x128xbf16> to vector<128x128xbf16>
    %133 = arith.truncf %128 : vector<8x128xf32> to vector<8x128xbf16>
    %cst_78 = arith.constant dense<0.000000e+00> : vector<8x128xf32>
    %134 = tpu.matmul %133, %132, %cst_78 {dimension_numbers = #tpu.dot_dimension_numbers<[1], [0], [0], [1], [0, 0, 1, 1], [], []>} : vector<8x128xbf16>, vector<128x128xbf16>, vector<8x128xf32> -> vector<8x128xf32>
    %c6 = arith.constant 6 : index
    %c0_79 = arith.constant 0 : index
    %135 = vector.load %arg4[%c6, %c0_79] : memref<10x128xf32, #tpu.memory_space<vmem>>, vector<1x128xf32>
    %136 = vector.broadcast %135 : vector<1x128xf32> to vector<8x128xf32>
    %137 = arith.addf %134, %136 : vector<8x128xf32>
    %cst_80 = arith.constant 0.000000e+00 : f32
    %138 = vector.broadcast %cst_80 : f32 to vector<8x128xf32>
    %139 = arith.maximumf %137, %138 : vector<8x128xf32>
    %140 = vector.shape_cast %130 : vector<1x128xf32> to vector<1x128xf32>
    %141 = vector.broadcast %140 : vector<1x128xf32> to vector<8x128xf32>
    %142 = arith.truncf %141 : vector<8x128xf32> to vector<8x128xbf16>
    %cst_81 = arith.constant dense<0.000000e+00> : vector<8x128xf32>
    %143 = tpu.matmul %142, %132, %cst_81 {dimension_numbers = #tpu.dot_dimension_numbers<[1], [0], [0], [1], [0, 0, 1, 1], [], []>} : vector<8x128xbf16>, vector<128x128xbf16>, vector<8x128xf32> -> vector<8x128xf32>
    %144 = vector.extract_strided_slice %143 {offsets = [0, 0], sizes = [1, 128], strides = [1, 1]} : vector<8x128xf32> to vector<1x128xf32>
    %c6_82 = arith.constant 6 : index
    %c0_83 = arith.constant 0 : index
    %145 = vector.load %arg4[%c6_82, %c0_83] : memref<10x128xf32, #tpu.memory_space<vmem>>, vector<1x128xf32>
    %146 = arith.addf %144, %145 : vector<1x128xf32>
    %cst_84 = arith.constant 0.000000e+00 : f32
    %147 = vector.broadcast %cst_84 : f32 to vector<1x128xf32>
    %148 = arith.maximumf %146, %147 : vector<1x128xf32>
    %cst_85 = arith.constant dense<0.000000e+00> : vector<128xf32>
    %149 = vector.multi_reduction <add>, %139, %cst_85 [0] : vector<8x128xf32> to vector<128xf32>
    %150 = vector.shape_cast %149 : vector<128xf32> to vector<1x128xf32>
    %cst_86 = arith.constant 0.000000e+00 : f32
    %151 = vector.broadcast %cst_86 : f32 to vector<1x128xf32>
    %152 = arith.mulf %151, %148 : vector<1x128xf32>
    %153 = arith.subf %150, %152 : vector<1x128xf32>
    %154 = arith.mulf %139, %139 : vector<8x128xf32>
    %cst_87 = arith.constant dense<0.000000e+00> : vector<128xf32>
    %155 = vector.multi_reduction <add>, %154, %cst_87 [0] : vector<8x128xf32> to vector<128xf32>
    %156 = vector.shape_cast %155 : vector<128xf32> to vector<1x128xf32>
    %cst_88 = arith.constant 0.000000e+00 : f32
    %157 = vector.broadcast %cst_88 : f32 to vector<1x128xf32>
    %158 = arith.mulf %157, %148 : vector<1x128xf32>
    %159 = arith.mulf %158, %148 : vector<1x128xf32>
    %160 = arith.subf %156, %159 : vector<1x128xf32>
    %c7 = arith.constant 7 : index
    %c0_89 = arith.constant 0 : index
    %161 = vector.load %arg4[%c7, %c0_89] : memref<10x128xf32, #tpu.memory_space<vmem>>, vector<1x128xf32>
    %c8 = arith.constant 8 : index
    %c0_90 = arith.constant 0 : index
    %162 = vector.load %arg4[%c8, %c0_90] : memref<10x128xf32, #tpu.memory_space<vmem>>, vector<1x128xf32>
    %cst_91 = arith.constant 1.250000e-01 : f32
    %163 = vector.broadcast %cst_91 : f32 to vector<1x128xf32>
    %164 = arith.mulf %153, %163 : vector<1x128xf32>
    %cst_92 = arith.constant 1.250000e-01 : f32
    %165 = vector.broadcast %cst_92 : f32 to vector<1x128xf32>
    %166 = arith.mulf %160, %165 : vector<1x128xf32>
    %167 = arith.mulf %164, %164 : vector<1x128xf32>
    %168 = arith.subf %166, %167 : vector<1x128xf32>
    %cst_93 = arith.constant 9.99999974E-6 : f32
    %169 = vector.broadcast %cst_93 : f32 to vector<1x128xf32>
    %170 = arith.addf %168, %169 : vector<1x128xf32>
    %171 = math.rsqrt %170 : vector<1x128xf32>
    %172 = arith.mulf %161, %171 : vector<1x128xf32>
    %173 = arith.mulf %164, %172 : vector<1x128xf32>
    %174 = arith.subf %162, %173 : vector<1x128xf32>
    %175 = vector.broadcast %172 : vector<1x128xf32> to vector<8x128xf32>
    %176 = arith.mulf %139, %175 : vector<8x128xf32>
    %177 = vector.broadcast %174 : vector<1x128xf32> to vector<8x128xf32>
    %178 = arith.addf %176, %177 : vector<8x128xf32>
    %179 = arith.truncf %178 : vector<8x128xf32> to vector<8x128xbf16>
    %c0_94 = arith.constant 0 : index
    %c0_95 = arith.constant 0 : index
    %180 = vector.load %arg3[%c0_94, %c0_95] : memref<128x128xbf16, #tpu.memory_space<vmem>>, vector<128x128xbf16>
    %cst_96 = arith.constant dense<0.000000e+00> : vector<8x128xf32>
    %181 = tpu.matmul %179, %180, %cst_96 {dimension_numbers = #tpu.dot_dimension_numbers<[1], [0], [0], [1], [0, 0, 1, 1], [], []>} : vector<8x128xbf16>, vector<128x128xbf16>, vector<8x128xf32> -> vector<8x128xf32>
    %c9 = arith.constant 9 : index
    %c0_97 = arith.constant 0 : index
    %182 = vector.load %arg4[%c9, %c0_97] : memref<10x128xf32, #tpu.memory_space<vmem>>, vector<1x128xf32>
    %183 = vector.broadcast %182 : vector<1x128xf32> to vector<8x128xf32>
    %184 = arith.addf %181, %183 : vector<8x128xf32>
    %c0_98 = arith.constant 0 : index
    %c0_99 = arith.constant 0 : index
    %185 = vector.load %arg5[%c0_98, %c0_99] : memref<8x128xf32, #tpu.memory_space<vmem>>, vector<8x128xf32>
    tpu.vector_store %arg5[%c0_98, %c0_99], %184 {strides = array<i32>} : memref<8x128xf32, #tpu.memory_space<vmem>>, vector<8x128xf32>,
    return
  }
}

</mosaic_0001>

<llo_original>
// kernel: tpu_custom_call.1
$region0: #{tpu_custom_call.1}
  #allocation0 [shape = 'u32[]', space=smem, size = 0x4, offset = 0x4, fixed_abs, tag = 'smem constant byte address 0x4 - core index']
  #allocation1 [shape = 'u32[144,128]{1,0:T(1,128)}', space=vmem, size = 0x12000, scoped, tag = 'internal scratch']
  #allocation2 [shape = 'bf16[2,8,128]{2,1,0:T(8,128)(2,1)}', space=vmem, size = 0x1000, scoped, tag = 'scratch operand']
  #allocation3 [shape = 's32[2]{0}', space=sflag, size = 0x8, scoped, tag = 'scratch operand']
  #allocation4 [shape = 'f32[8,128]{1,0:T(8,128)}', space=vmem, size = 0x1000, scoped, tag = 'scratch operand']
  #allocation5 [shape = 'f32[1,128]{1,0:T(1,128)}', space=vmem, size = 0x200, scoped, tag = 'scratch operand']
  #allocation6 [shape = 'f32[1,128]{1,0:T(1,128)}', space=vmem, size = 0x200, scoped, tag = 'scratch operand']
  #allocation16 [shape = 's32[]', space=sflag, size = 0x4, offset = 0, fixed_abs, tag = 'sflag constant byte address 0x0 - dummy sync flag']
  #allocation17 [shape = 's32[]', space=sflag, size = 0x4, offset = 0, fixed_abs, tag = 'sflag constant byte address 0x0 - dummy sync flag']
  #allocation18 [shape = 'u32[]', space=smem, size = 0x4, offset = 0x44, fixed_abs, tag = 'smem constant byte address 0x44 - assertion arg 0']
  #allocation19 [shape = 'u32[]', space=smem, size = 0x4, offset = 0x48, fixed_abs, tag = 'smem constant byte address 0x48 - assertion arg 1']
  %s0 = inlined_call_operand.hbm [shape: bf16[1,8,128], index: 0, kind: input, shape index: {}]
  %s1 = inlined_call_operand.hbm [shape: bf16[128,128], index: 1, kind: input, shape index: {}]
  %s2 = inlined_call_operand.hbm [shape: bf16[2,128,128], index: 2, kind: input, shape index: {}]
  %s3 = inlined_call_operand.hbm [shape: bf16[128,128], index: 3, kind: input, shape index: {}]
  %s4 = inlined_call_operand.hbm [shape: f32[10,128], index: 4, kind: input, shape index: {}]
  %s5 = inlined_call_operand.hbm [shape: f32[8,128], index: 5, kind: output, shape index: {}]
  %s6 = sld [smem:[#allocation0]]
  $region46: #{tpu_custom_call.1} parent=0
    _
  %s8 = ssub.s32 1, %s6
  %s9 = scalar_select 0, %s8, %s6
  $region1: #{tpu_custom_call.1} parent=0
    #allocation7 [shape = 'u8[32768]{0}', space=vmem, size = 0x8000, scoped, tag = 'input window, operand 1, single buffered']
    #allocation8 [shape = 's32[1]{0}', space=sflag, size = 0x4, scoped, tag = 'scoped memory for tpu_custom_call.1']
    #allocation9 [shape = 's32[1]{0}', space=sflag, size = 0x4, scoped, tag = 'scoped memory for tpu_custom_call.1']
    #allocation10 [shape = 'u8[65536]{0}', space=vmem, size = 0x10000, scoped, tag = 'input window, operand 2, single buffered']
    #allocation11 [shape = 's32[1]{0}', space=sflag, size = 0x4, scoped, tag = 'scoped memory for tpu_custom_call.1']
    #allocation12 [shape = 'u8[32768]{0}', space=vmem, size = 0x8000, scoped, tag = 'input window, operand 3, single buffered']
    #allocation13 [shape = 'u8[8192]{0}', space=vmem, size = 0x2000, scoped, tag = 'input window, operand 4, single buffered']
    #allocation14 [shape = 's32[1]{0}', space=sflag, size = 0x4, scoped, tag = 'scoped memory for tpu_custom_call.1']
    #allocation15 [shape = 'u8[4096]{0}', space=vmem, size = 0x1000, scoped, tag = 'output window, operand 0, single buffered']
    %10 = vsyncpa [#allocation8], 0
    %11 = vsyncpa [#allocation11], 0
    %12 = vsyncpa [#allocation14], 0
    %13 = vsyncpa [#allocation9], 0
    // Predicated region
    $region2: #{tpu_custom_call.1} parent=1 // pred_check
      _
    $region3: #{tpu_custom_call.1} parent=1 // pred_check_branch
      %15 = sbr.rel (0) target = $region5
    $region4: #{tpu_custom_call.1} parent=1 // pred_region
      %s17 = ssub.s32 1024, 1024
      %18 = vsyncadd [#allocation8], %s17
      %s19 = sshll.u32 [#allocation7], 4
      %s20 = int_to_ptr.vmem [resolvable:$true] %s19
      %25 = dma.hbm_to_vmem [thread:$0]  %s1, 1024, %s20, [#allocation8], 64, 64, 4
    $region5: #{tpu_custom_call.1} parent=1 // pred_fallthru
      _
    // Predicated region
    $region6: #{tpu_custom_call.1} parent=1 // pred_check
      _
    $region7: #{tpu_custom_call.1} parent=1 // pred_check_branch
      %27 = sbr.rel (0) target = $region9
    $region8: #{tpu_custom_call.1} parent=1 // pred_region
      %s29 = ssub.s32 2048, 2048
      %30 = vsyncadd [#allocation11], %s29
      %s31 = sshll.u32 [#allocation10], 4
      %s32 = int_to_ptr.vmem [resolvable:$true] %s31
      %37 = dma.hbm_to_vmem [thread:$0]  %s2, 2048, %s32, [#allocation11], 64, 64, 4
    $region9: #{tpu_custom_call.1} parent=1 // pred_fallthru
      _
    // Predicated region
    $region10: #{tpu_custom_call.1} parent=1 // pred_check
      _
    $region11: #{tpu_custom_call.1} parent=1 // pred_check_branch
      %39 = sbr.rel (0) target = $region13
    $region12: #{tpu_custom_call.1} parent=1 // pred_region
      %s41 = ssub.s32 1024, 1024
      %42 = vsyncadd [#allocation11], %s41
      %s43 = sshll.u32 [#allocation12], 4
      %s44 = int_to_ptr.vmem [resolvable:$true] %s43
      %49 = dma.hbm_to_vmem [thread:$0]  %s3, 1024, %s44, [#allocation11], 64, 64, 4
    $region13: #{tpu_custom_call.1} parent=1 // pred_fallthru
      _
    // Predicated region
    $region14: #{tpu_custom_call.1} parent=1 // pred_check
      _
    $region15: #{tpu_custom_call.1} parent=1 // pred_check_branch
      %51 = sbr.rel (0) target = $region17
    $region16: #{tpu_custom_call.1} parent=1 // pred_region
      %s53 = ssub.s32 256, 256
      %54 = vsyncadd [#allocation14], %s53
      %s55 = sshll.u32 [#allocation13], 4
      %s56 = int_to_ptr.vmem [resolvable:$true] %s55
      %61 = dma.hbm_to_vmem [thread:$0]  %s4, 256, %s56, [#allocation14], 128, 128, 8
    $region17: #{tpu_custom_call.1} parent=1 // pred_fallthru
      _
    // Predicated region
    $region18: #{tpu_custom_call.1} parent=1 // pred_check
      _
    $region19: #{tpu_custom_call.1} parent=1 // pred_check_branch
      %63 = sbr.rel (0) target = $region21
    $region20: #{tpu_custom_call.1} parent=1 // pred_region
      %64 = dma.done [#allocation8], 1024
    $region21: #{tpu_custom_call.1} parent=1 // pred_fallthru
      _
    // Predicated region
    $region22: #{tpu_custom_call.1} parent=1 // pred_check
      _
    $region23: #{tpu_custom_call.1} parent=1 // pred_check_branch
      %66 = sbr.rel (0) target = $region25
    $region24: #{tpu_custom_call.1} parent=1 // pred_region
      %67 = dma.done [#allocation11], 2048
    $region25: #{tpu_custom_call.1} parent=1 // pred_fallthru
      _
    // Predicated region
    $region26: #{tpu_custom_call.1} parent=1 // pred_check
      _
    $region27: #{tpu_custom_call.1} parent=1 // pred_check_branch
      %69 = sbr.rel (0) target = $region29
    $region28: #{tpu_custom_call.1} parent=1 // pred_region
      %70 = dma.done [#allocation11], 1024
    $region29: #{tpu_custom_call.1} parent=1 // pred_fallthru
      _
    // Predicated region
    $region30: #{tpu_custom_call.1} parent=1 // pred_check
      _
    $region31: #{tpu_custom_call.1} parent=1 // pred_check_branch
      %72 = sbr.rel (0) target = $region33
    $region32: #{tpu_custom_call.1} parent=1 // pred_region
      %73 = dma.done [#allocation14], 256
    $region33: #{tpu_custom_call.1} parent=1 // pred_fallthru
      _
    // Predicated region
    $region34: #{tpu_custom_call.1} parent=1 // pred_check
      _
    $region35: #{tpu_custom_call.1} parent=1 // pred_check_branch
      %76 = sbr.rel target = $region37
    $region36: #{tpu_custom_call.1} parent=1 // pred_region
      %77 = sst [smem:[#allocation18]] [#allocation17]
      %78 = sst [smem:[#allocation19]] [#allocation16]
    $region37: #{tpu_custom_call.1} parent=1 // pred_fallthru
      _
    %80 = shalt.err (0)
    %s82 = sshll.u32 [#allocation2], 4
    %s83 = int_to_ptr.vmem [resolvable:$true] %s82
    %85 = dma.hbm_to_vmem [thread:$0]  %s0, 64, %s83, [#allocation3]
    %86 = vst [vmem:[#allocation5] sm:$0x1] 0.0
    %87 = vst [vmem:[#allocation6] sm:$0x1] 0.0
    %s88 = smul.u32 4, 1
    %s89 = smul.u32 %s88, 1
    %s90 = sshll.u32 %s89, 4
    %91 = dma.done [#allocation3], %s90
    %v92 = vld [vmem:[#allocation2] sm:$0xf]
    %v93 = vld [vmem:[#allocation7] sm:$0xf]
    %v94 = vld [vmem:[#allocation7 + $0x4] sm:$0xf]
    %v95 = vld [vmem:[#allocation7 + $0x8] sm:$0xf]
    %v96 = vld [vmem:[#allocation7 + $0xc] sm:$0xf]
    %v97 = vld [vmem:[#allocation7 + $0x10] sm:$0xf]
    %v98 = vld [vmem:[#allocation7 + $0x14] sm:$0xf]
    %v99 = vld [vmem:[#allocation7 + $0x18] sm:$0xf]
    %v100 = vld [vmem:[#allocation7 + $0x1c] sm:$0xf]
    %v101 = vld [vmem:[#allocation7 + $0x20] sm:$0xf]
    %v102 = vld [vmem:[#allocation7 + $0x24] sm:$0xf]
    %v103 = vld [vmem:[#allocation7 + $0x28] sm:$0xf]
    %v104 = vld [vmem:[#allocation7 + $0x2c] sm:$0xf]
    %v105 = vld [vmem:[#allocation7 + $0x30] sm:$0xf]
    %v106 = vld [vmem:[#allocation7 + $0x34] sm:$0xf]
    %v107 = vld [vmem:[#allocation7 + $0x38] sm:$0xf]
    %v108 = vld [vmem:[#allocation7 + $0x3c] sm:$0xf]
    %v109 = vld [vmem:[#allocation13] sm:$0x1]
    %v110 = vlaneseq
    %v111 = vshrl.u32 %v110, 7
    %v112 = vsub.s32 0, %v111
    %v113 = vrot.slane %v109, %v112
    %v130 = vunpack.c.l.b16 %v93
    %v131 = vunpack.c.l.b16 %v94
    %v132 = vunpack.c.l.b16 %v95
    %v133 = vunpack.c.l.b16 %v96
    %v134 = vunpack.c.l.b16 %v97
    %v135 = vunpack.c.l.b16 %v98
    %v136 = vunpack.c.l.b16 %v99
    %v137 = vunpack.c.l.b16 %v100
    %v138 = vunpack.c.l.b16 %v101
    %v139 = vunpack.c.l.b16 %v102
    %v140 = vunpack.c.l.b16 %v103
    %v141 = vunpack.c.l.b16 %v104
    %v142 = vunpack.c.l.b16 %v105
    %v143 = vunpack.c.l.b16 %v106
    %v144 = vunpack.c.l.b16 %v107
    %v145 = vunpack.c.l.b16 %v108
    %v146 = vpack.c.b16 %v131, %v130
    %v147 = vpack.c.b16 %v133, %v132
    %v148 = vpack.c.b16 %v135, %v134
    %v149 = vpack.c.b16 %v137, %v136
    %v150 = vpack.c.b16 %v139, %v138
    %v151 = vpack.c.b16 %v141, %v140
    %v152 = vpack.c.b16 %v143, %v142
    %v153 = vpack.c.b16 %v145, %v144
    %162 = vmatprep.subr.bf16.mxu0 0
    %163 = vmatpush1.bf16.msra.mxu0 %v146
    %164 = vmatprep.subr.bf16.mxu0 0
    %165 = vmatpush1.bf16.msra.mxu0 %v147
    %166 = vmatprep.subr.bf16.mxu0 0
    %167 = vmatpush1.bf16.msra.mxu0 %v148
    %168 = vmatprep.subr.bf16.mxu0 0
    %169 = vmatpush1.bf16.msra.mxu0 %v149
    %170 = vmatprep.subr.bf16.mxu0 0
    %171 = vmatpush1.bf16.msra.mxu0 %v150
    %172 = vmatprep.subr.bf16.mxu0 0
    %173 = vmatpush1.bf16.msra.mxu0 %v151
    %174 = vmatprep.subr.bf16.mxu0 0
    %175 = vmatpush1.bf16.msra.mxu0 %v152
    %176 = vmatprep.subr.bf16.mxu0 0
    %177 = vmatpush1.bf16.msra.mxu0 %v153
    %178 = vmatprep.subr.bf16.mxu0 0
    %179 = vmatpush1.bf16.msra.mxu0 0
    %180 = vmatprep.subr.bf16.mxu0 0
    %181 = vmatpush1.bf16.msra.mxu0 0
    %182 = vmatprep.subr.bf16.mxu0 0
    %183 = vmatpush1.bf16.msra.mxu0 0
    %184 = vmatprep.subr.bf16.mxu0 0
    %185 = vmatpush1.bf16.msra.mxu0 0
    %186 = vmatprep.subr.bf16.mxu0 0
    %187 = vmatpush1.bf16.msra.mxu0 0
    %188 = vmatprep.subr.bf16.mxu0 0
    %189 = vmatpush1.bf16.msra.mxu0 0
    %190 = vmatprep.subr.bf16.mxu0 0
    %191 = vmatpush1.bf16.msra.mxu0 0
    %192 = vmatprep.subr.bf16.mxu0 0
    %193 = vmatpush1.bf16.msra.mxu0 0
    %194 = vmatprep.mubr.bf16.mxu0 0
    %195 = vmatmul.mubr.bf16.gmra.mrb[0].mxu0 %v92
    %v196 = vpop.f32.mrb[0].mxu0
    %v197 = vadd.f32 %v113, %v196
    %v198 = vpop.f32.mrb[0].mxu0
    %v199 = vpop.f32.mrb[0].mxu0
    %v200 = vpop.f32.mrb[0].mxu0
    %201 = vdwg.mxu0
    %v202 = vmax.f32 %v197, 0.0
    %203 = vst [vmem:[#allocation4] sm:$0xff] %v202
    %v204 = vld [vmem:[#allocation5] sm:$0x1]
    %v205 = vrot.slane %v202, 4
    %v206 = vadd.f32 %v202, %v205
    %v207 = vrot.slane %v206, 2
    %v208 = vadd.f32 %v206, %v207
    %v209 = vrot.slane %v208, 1
    %v210 = vadd.f32 %v208, %v209
    %v211 = vadd.f32 %v204, %v210
    %212 = vst [vmem:[#allocation5] sm:$0x1] %v211
    %v213 = vld [vmem:[#allocation6] sm:$0x1]
    %v214 = vmul.f32 %v202, %v202
    %v215 = vrot.slane %v214, 4
    %v216 = vadd.f32 %v214, %v215
    %v217 = vrot.slane %v216, 2
    %v218 = vadd.f32 %v216, %v217
    %v219 = vrot.slane %v218, 1
    %v220 = vadd.f32 %v218, %v219
    %v221 = vadd.f32 %v213, %v220
    %222 = vst [vmem:[#allocation6] sm:$0x1] %v221
    %v223 = vld [vmem:[#allocation13] sm:$0x1]
    %v224 = vmax.f32 %v223, 0.0
    %v225 = vld [vmem:[#allocation5] sm:$0x1]
    %v226 = vmul.f32 %v224, 0.0
    %v227 = vsub.f32 %v225, %v226
    %v228 = vld [vmem:[#allocation6] sm:$0x1]
    %v229 = vmul.f32 %v226, %v224
    %v230 = vsub.f32 %v228, %v229
    %v231 = vld [vmem:[#allocation13 + $0x1] sm:$0x1]
    %v232 = vld [vmem:[#allocation13 + $0x2] sm:$0x1]
    %v233 = vmul.f32 %v227, 0.125
    %v234 = vmul.f32 %v230, 0.125
    %v235 = vmul.f32 %v233, %v233
    %v236 = vsub.f32 %v234, %v235
    %v237 = vadd.f32 %v236, 1e-05
    %v238 = vrsqrt.pop %v237
    %v239 = vmul.f32 %v231, %v238
    %v240 = vmul.f32 %v233, %v239
    %v241 = vsub.f32 %v232, %v240
    %v242 = vld [vmem:[#allocation4] sm:$0xff]
    %v243 = vlaneseq
    %v244 = vshrl.u32 %v243, 7
    %v245 = vsub.s32 0, %v244
    %v246 = vrot.slane %v239, %v245
    %v247 = vmul.f32 %v242, %v246
    %v248 = vlaneseq
    %v249 = vshrl.u32 %v248, 7
    %v250 = vsub.s32 0, %v249
    %v251 = vrot.slane %v241, %v250
    %v252 = vadd.f32 %v247, %v251
    %v253 = vmul.f32 %v224, %v239
    %v254 = vadd.f32 %v253, %v241
    %v255 = vld [vmem:[#allocation10] sm:$0xf]
    %v256 = vld [vmem:[#allocation10 + $0x4] sm:$0xf]
    %v257 = vld [vmem:[#allocation10 + $0x8] sm:$0xf]
    %v258 = vld [vmem:[#allocation10 + $0xc] sm:$0xf]
    %v259 = vld [vmem:[#allocation10 + $0x10] sm:$0xf]
    %v260 = vld [vmem:[#allocation10 + $0x14] sm:$0xf]
    %v261 = vld [vmem:[#allocation10 + $0x18] sm:$0xf]
    %v262 = vld [vmem:[#allocation10 + $0x1c] sm:$0xf]
    %v263 = vld [vmem:[#allocation10 + $0x20] sm:$0xf]
    %v264 = vld [vmem:[#allocation10 + $0x24] sm:$0xf]
    %v265 = vld [vmem:[#allocation10 + $0x28] sm:$0xf]
    %v266 = vld [vmem:[#allocation10 + $0x2c] sm:$0xf]
    %v267 = vld [vmem:[#allocation10 + $0x30] sm:$0xf]
    %v268 = vld [vmem:[#allocation10 + $0x34] sm:$0xf]
    %v269 = vld [vmem:[#allocation10 + $0x38] sm:$0xf]
    %v270 = vld [vmem:[#allocation10 + $0x3c] sm:$0xf]
    %v271 = vpack.c.bf16 %v252, %v252
    %v272 = vld [vmem:[#allocation13 + $0x3] sm:$0x1]
    %v273 = vlaneseq
    %v274 = vshrl.u32 %v273, 7
    %v275 = vsub.s32 0, %v274
    %v276 = vrot.slane %v272, %v275
    %v293 = vunpack.c.l.b16 %v255
    %v294 = vunpack.c.l.b16 %v256
    %v295 = vunpack.c.l.b16 %v257
    %v296 = vunpack.c.l.b16 %v258
    %v297 = vunpack.c.l.b16 %v259
    %v298 = vunpack.c.l.b16 %v260
    %v299 = vunpack.c.l.b16 %v261
    %v300 = vunpack.c.l.b16 %v262
    %v301 = vunpack.c.l.b16 %v263
    %v302 = vunpack.c.l.b16 %v264
    %v303 = vunpack.c.l.b16 %v265
    %v304 = vunpack.c.l.b16 %v266
    %v305 = vunpack.c.l.b16 %v267
    %v306 = vunpack.c.l.b16 %v268
    %v307 = vunpack.c.l.b16 %v269
    %v308 = vunpack.c.l.b16 %v270
    %v309 = vpack.c.b16 %v294, %v293
    %v310 = vpack.c.b16 %v296, %v295
    %v311 = vpack.c.b16 %v298, %v297
    %v312 = vpack.c.b16 %v300, %v299
    %v313 = vpack.c.b16 %v302, %v301
    %v314 = vpack.c.b16 %v304, %v303
    %v315 = vpack.c.b16 %v306, %v305
    %v316 = vpack.c.b16 %v308, %v307
    %325 = vmatprep.subr.bf16.mxu0 0
    %326 = vmatpush1.bf16.msra.mxu0 %v309
    %327 = vmatprep.subr.bf16.mxu0 0
    %328 = vmatpush1.bf16.msra.mxu0 %v310
    %329 = vmatprep.subr.bf16.mxu0 0
    %330 = vmatpush1.bf16.msra.mxu0 %v311
    %331 = vmatprep.subr.bf16.mxu0 0
    %332 = vmatpush1.bf16.msra.mxu0 %v312
    %333 = vmatprep.subr.bf16.mxu0 0
    %334 = vmatpush1.bf16.msra.mxu0 %v313
    %335 = vmatprep.subr.bf16.mxu0 0
    %336 = vmatpush1.bf16.msra.mxu0 %v314
    %337 = vmatprep.subr.bf16.mxu0 0
    %338 = vmatpush1.bf16.msra.mxu0 %v315
    %339 = vmatprep.subr.bf16.mxu0 0
    %340 = vmatpush1.bf16.msra.mxu0 %v316
    %341 = vmatprep.subr.bf16.mxu0 0
    %342 = vmatpush1.bf16.msra.mxu0 0
    %343 = vmatprep.subr.bf16.mxu0 0
    %344 = vmatpush1.bf16.msra.mxu0 0
    %345 = vmatprep.subr.bf16.mxu0 0
    %346 = vmatpush1.bf16.msra.mxu0 0
    %347 = vmatprep.subr.bf16.mxu0 0
    %348 = vmatpush1.bf16.msra.mxu0 0
    %349 = vmatprep.subr.bf16.mxu0 0
    %350 = vmatpush1.bf16.msra.mxu0 0
    %351 = vmatprep.subr.bf16.mxu0 0
    %352 = vmatpush1.bf16.msra.mxu0 0
    %353 = vmatprep.subr.bf16.mxu0 0
    %354 = vmatpush1.bf16.msra.mxu0 0
    %355 = vmatprep.subr.bf16.mxu0 0
    %356 = vmatpush1.bf16.msra.mxu0 0
    %357 = vmatprep.mubr.bf16.mxu0 0
    %358 = vmatmul.mubr.bf16.gmra.mrb[0].mxu0 %v271
    %v359 = vpop.f32.mrb[0].mxu0
    %v360 = vadd.f32 %v276, %v359
    %v361 = vpop.f32.mrb[0].mxu0
    %v362 = vpop.f32.mrb[0].mxu0
    %v363 = vpop.f32.mrb[0].mxu0
    %364 = vdwg.mxu0
    %v365 = vmax.f32 %v360, 0.0
    %v366 = vlaneseq
    %v367 = vshrl.u32 %v366, 7
    %v368 = vsub.s32 0, %v367
    %v369 = vrot.slane %v254, %v368
    %v370 = vpack.c.bf16 %v369, %v369
    %371 = vmatprep.subr.bf16.mxu0 0
    %372 = vmatpush1.bf16.msra.mxu0 %v309
    %373 = vmatprep.subr.bf16.mxu0 0
    %374 = vmatpush1.bf16.msra.mxu0 %v310
    %375 = vmatprep.subr.bf16.mxu0 0
    %376 = vmatpush1.bf16.msra.mxu0 %v311
    %377 = vmatprep.subr.bf16.mxu0 0
    %378 = vmatpush1.bf16.msra.mxu0 %v312
    %379 = vmatprep.subr.bf16.mxu0 0
    %380 = vmatpush1.bf16.msra.mxu0 %v313
    %381 = vmatprep.subr.bf16.mxu0 0
    %382 = vmatpush1.bf16.msra.mxu0 %v314
    %383 = vmatprep.subr.bf16.mxu0 0
    %384 = vmatpush1.bf16.msra.mxu0 %v315
    %385 = vmatprep.subr.bf16.mxu0 0
    %386 = vmatpush1.bf16.msra.mxu0 %v316
    %387 = vmatprep.subr.bf16.mxu0 0
    %388 = vmatpush1.bf16.msra.mxu0 0
    %389 = vmatprep.subr.bf16.mxu0 0
    %390 = vmatpush1.bf16.msra.mxu0 0
    %391 = vmatprep.subr.bf16.mxu0 0
    %392 = vmatpush1.bf16.msra.mxu0 0
    %393 = vmatprep.subr.bf16.mxu0 0
    %394 = vmatpush1.bf16.msra.mxu0 0
    %395 = vmatprep.subr.bf16.mxu0 0
    %396 = vmatpush1.bf16.msra.mxu0 0
    %397 = vmatprep.subr.bf16.mxu0 0
    %398 = vmatpush1.bf16.msra.mxu0 0
    %399 = vmatprep.subr.bf16.mxu0 0
    %400 = vmatpush1.bf16.msra.mxu0 0
    %401 = vmatprep.subr.bf16.mxu0 0
    %402 = vmatpush1.bf16.msra.mxu0 0
    %403 = vmatprep.mubr.bf16.mxu0 0
    %404 = vmatmul.mubr.bf16.gmra.mrb[0].mxu0 %v370
    %v405 = vpop.f32.mrb[0].mxu0
    %v406 = vadd.f32 0.0, %v405
    %v407 = vpop.f32.mrb[0].mxu0
    %v408 = vpop.f32.mrb[0].mxu0
    %v409 = vpop.f32.mrb[0].mxu0
    %410 = vdwg.mxu0
    %v411 = vadd.f32 %v406, %v272
    %v412 = vmax.f32 %v411, 0.0
    %v413 = vrot.slane %v365, 4
    %v414 = vadd.f32 %v365, %v413
    %v415 = vrot.slane %v414, 2
    %v416 = vadd.f32 %v414, %v415
    %v417 = vrot.slane %v416, 1
    %v418 = vadd.f32 %v416, %v417
    %v419 = vmul.f32 %v412, 0.0
    %v420 = vsub.f32 %v418, %v419
    %v421 = vmul.f32 %v365, %v365
    %v422 = vrot.slane %v421, 4
    %v423 = vadd.f32 %v421, %v422
    %v424 = vrot.slane %v423, 2
    %v425 = vadd.f32 %v423, %v424
    %v426 = vrot.slane %v425, 1
    %v427 = vadd.f32 %v425, %v426
    %v428 = vmul.f32 %v419, %v412
    %v429 = vsub.f32 %v427, %v428
    %v430 = vld [vmem:[#allocation13 + $0x4] sm:$0x1]
    %v431 = vld [vmem:[#allocation13 + $0x5] sm:$0x1]
    %v432 = vmul.f32 %v420, 0.125
    %v433 = vmul.f32 %v429, 0.125
    %v434 = vmul.f32 %v432, %v432
    %v435 = vsub.f32 %v433, %v434
    %v436 = vadd.f32 %v435, 1e-05
    %v437 = vrsqrt.pop %v436
    %v438 = vmul.f32 %v430, %v437
    %v439 = vmul.f32 %v432, %v438
    %v440 = vsub.f32 %v431, %v439
    %v441 = vlaneseq
    %v442 = vshrl.u32 %v441, 7
    %v443 = vsub.s32 0, %v442
    %v444 = vrot.slane %v438, %v443
    %v445 = vmul.f32 %v365, %v444
    %v446 = vlaneseq
    %v447 = vshrl.u32 %v446, 7
    %v448 = vsub.s32 0, %v447
    %v449 = vrot.slane %v440, %v448
    %v450 = vadd.f32 %v445, %v449
    %v451 = vmul.f32 %v412, %v438
    %v452 = vadd.f32 %v451, %v440
    %s453 = scalar_lea.vmem [#allocation10], 64
    %v454 = vld [vmem:[%s453] sm:$0xf]
    %v455 = vld [vmem:[%s453 + $0x4] sm:$0xf]
    %v456 = vld [vmem:[%s453 + $0x8] sm:$0xf]
    %v457 = vld [vmem:[%s453 + $0xc] sm:$0xf]
    %v458 = vld [vmem:[%s453 + $0x10] sm:$0xf]
    %v459 = vld [vmem:[%s453 + $0x14] sm:$0xf]
    %v460 = vld [vmem:[%s453 + $0x18] sm:$0xf]
    %v461 = vld [vmem:[%s453 + $0x1c] sm:$0xf]
    %v462 = vld [vmem:[%s453 + $0x20] sm:$0xf]
    %v463 = vld [vmem:[%s453 + $0x24] sm:$0xf]
    %v464 = vld [vmem:[%s453 + $0x28] sm:$0xf]
    %v465 = vld [vmem:[%s453 + $0x2c] sm:$0xf]
    %v466 = vld [vmem:[%s453 + $0x30] sm:$0xf]
    %v467 = vld [vmem:[%s453 + $0x34] sm:$0xf]
    %v468 = vld [vmem:[%s453 + $0x38] sm:$0xf]
    %v469 = vld [vmem:[%s453 + $0x3c] sm:$0xf]
    %v470 = vpack.c.bf16 %v450, %v450
    %v471 = vld [vmem:[#allocation13 + $0x6] sm:$0x1]
    %v472 = vlaneseq
    %v473 = vshrl.u32 %v472, 7
    %v474 = vsub.s32 0, %v473
    %v475 = vrot.slane %v471, %v474
    %v492 = vunpack.c.l.b16 %v454
    %v493 = vunpack.c.l.b16 %v455
    %v494 = vunpack.c.l.b16 %v456
    %v495 = vunpack.c.l.b16 %v457
    %v496 = vunpack.c.l.b16 %v458
    %v497 = vunpack.c.l.b16 %v459
    %v498 = vunpack.c.l.b16 %v460
    %v499 = vunpack.c.l.b16 %v461
    %v500 = vunpack.c.l.b16 %v462
    %v501 = vunpack.c.l.b16 %v463
    %v502 = vunpack.c.l.b16 %v464
    %v503 = vunpack.c.l.b16 %v465
    %v504 = vunpack.c.l.b16 %v466
    %v505 = vunpack.c.l.b16 %v467
    %v506 = vunpack.c.l.b16 %v468
    %v507 = vunpack.c.l.b16 %v469
    %v508 = vpack.c.b16 %v493, %v492
    %v509 = vpack.c.b16 %v495, %v494
    %v510 = vpack.c.b16 %v497, %v496
    %v511 = vpack.c.b16 %v499, %v498
    %v512 = vpack.c.b16 %v501, %v500
    %v513 = vpack.c.b16 %v503, %v502
    %v514 = vpack.c.b16 %v505, %v504
    %v515 = vpack.c.b16 %v507, %v506
    %524 = vmatprep.subr.bf16.mxu0 0
    %525 = vmatpush1.bf16.msra.mxu0 %v508
    %526 = vmatprep.subr.bf16.mxu0 0
    %527 = vmatpush1.bf16.msra.mxu0 %v509
    %528 = vmatprep.subr.bf16.mxu0 0
    %529 = vmatpush1.bf16.msra.mxu0 %v510
    %530 = vmatprep.subr.bf16.mxu0 0
    %531 = vmatpush1.bf16.msra.mxu0 %v511
    %532 = vmatprep.subr.bf16.mxu0 0
    %533 = vmatpush1.bf16.msra.mxu0 %v512
    %534 = vmatprep.subr.bf16.mxu0 0
    %535 = vmatpush1.bf16.msra.mxu0 %v513
    %536 = vmatprep.subr.bf16.mxu0 0
    %537 = vmatpush1.bf16.msra.mxu0 %v514
    %538 = vmatprep.subr.bf16.mxu0 0
    %539 = vmatpush1.bf16.msra.mxu0 %v515
    %540 = vmatprep.subr.bf16.mxu0 0
    %541 = vmatpush1.bf16.msra.mxu0 0
    %542 = vmatprep.subr.bf16.mxu0 0
    %543 = vmatpush1.bf16.msra.mxu0 0
    %544 = vmatprep.subr.bf16.mxu0 0
    %545 = vmatpush1.bf16.msra.mxu0 0
    %546 = vmatprep.subr.bf16.mxu0 0
    %547 = vmatpush1.bf16.msra.mxu0 0
    %548 = vmatprep.subr.bf16.mxu0 0
    %549 = vmatpush1.bf16.msra.mxu0 0
    %550 = vmatprep.subr.bf16.mxu0 0
    %551 = vmatpush1.bf16.msra.mxu0 0
    %552 = vmatprep.subr.bf16.mxu0 0
    %553 = vmatpush1.bf16.msra.mxu0 0
    %554 = vmatprep.subr.bf16.mxu0 0
    %555 = vmatpush1.bf16.msra.mxu0 0
    %556 = vmatprep.mubr.bf16.mxu0 0
    %557 = vmatmul.mubr.bf16.gmra.mrb[0].mxu0 %v470
    %v558 = vpop.f32.mrb[0].mxu0
    %v559 = vadd.f32 %v475, %v558
    %v560 = vpop.f32.mrb[0].mxu0
    %v561 = vpop.f32.mrb[0].mxu0
    %v562 = vpop.f32.mrb[0].mxu0
    %563 = vdwg.mxu0
    %v564 = vmax.f32 %v559, 0.0
    %v565 = vlaneseq
    %v566 = vshrl.u32 %v565, 7
    %v567 = vsub.s32 0, %v566
    %v568 = vrot.slane %v452, %v567
    %v569 = vpack.c.bf16 %v568, %v568
    %570 = vmatprep.subr.bf16.mxu0 0
    %571 = vmatpush1.bf16.msra.mxu0 %v508
    %572 = vmatprep.subr.bf16.mxu0 0
    %573 = vmatpush1.bf16.msra.mxu0 %v509
    %574 = vmatprep.subr.bf16.mxu0 0
    %575 = vmatpush1.bf16.msra.mxu0 %v510
    %576 = vmatprep.subr.bf16.mxu0 0
    %577 = vmatpush1.bf16.msra.mxu0 %v511
    %578 = vmatprep.subr.bf16.mxu0 0
    %579 = vmatpush1.bf16.msra.mxu0 %v512
    %580 = vmatprep.subr.bf16.mxu0 0
    %581 = vmatpush1.bf16.msra.mxu0 %v513
    %582 = vmatprep.subr.bf16.mxu0 0
    %583 = vmatpush1.bf16.msra.mxu0 %v514
    %584 = vmatprep.subr.bf16.mxu0 0
    %585 = vmatpush1.bf16.msra.mxu0 %v515
    %586 = vmatprep.subr.bf16.mxu0 0
    %587 = vmatpush1.bf16.msra.mxu0 0
    %588 = vmatprep.subr.bf16.mxu0 0
    %589 = vmatpush1.bf16.msra.mxu0 0
    %590 = vmatprep.subr.bf16.mxu0 0
    %591 = vmatpush1.bf16.msra.mxu0 0
    %592 = vmatprep.subr.bf16.mxu0 0
    %593 = vmatpush1.bf16.msra.mxu0 0
    %594 = vmatprep.subr.bf16.mxu0 0
    %595 = vmatpush1.bf16.msra.mxu0 0
    %596 = vmatprep.subr.bf16.mxu0 0
    %597 = vmatpush1.bf16.msra.mxu0 0
    %598 = vmatprep.subr.bf16.mxu0 0
    %599 = vmatpush1.bf16.msra.mxu0 0
    %600 = vmatprep.subr.bf16.mxu0 0
    %601 = vmatpush1.bf16.msra.mxu0 0
    %602 = vmatprep.mubr.bf16.mxu0 0
    %603 = vmatmul.mubr.bf16.gmra.mrb[0].mxu0 %v569
    %v604 = vpop.f32.mrb[0].mxu0
    %v605 = vadd.f32 0.0, %v604
    %v606 = vpop.f32.mrb[0].mxu0
    %v607 = vpop.f32.mrb[0].mxu0
    %v608 = vpop.f32.mrb[0].mxu0
    %609 = vdwg.mxu0
    %v610 = vadd.f32 %v605, %v471
    %v611 = vmax.f32 %v610, 0.0
    %v612 = vrot.slane %v564, 4
    %v613 = vadd.f32 %v564, %v612
    %v614 = vrot.slane %v613, 2
    %v615 = vadd.f32 %v613, %v614
    %v616 = vrot.slane %v615, 1
    %v617 = vadd.f32 %v615, %v616
    %v618 = vmul.f32 %v611, 0.0
    %v619 = vsub.f32 %v617, %v618
    %v620 = vmul.f32 %v564, %v564
    %v621 = vrot.slane %v620, 4
    %v622 = vadd.f32 %v620, %v621
    %v623 = vrot.slane %v622, 2
    %v624 = vadd.f32 %v622, %v623
    %v625 = vrot.slane %v624, 1
    %v626 = vadd.f32 %v624, %v625
    %v627 = vmul.f32 %v618, %v611
    %v628 = vsub.f32 %v626, %v627
    %v629 = vld [vmem:[#allocation13 + $0x7] sm:$0x1]
    %v630 = vld [vmem:[#allocation13 + $0x8] sm:$0x1]
    %v631 = vmul.f32 %v619, 0.125
    %v632 = vmul.f32 %v628, 0.125
    %v633 = vmul.f32 %v631, %v631
    %v634 = vsub.f32 %v632, %v633
    %v635 = vadd.f32 %v634, 1e-05
    %v636 = vrsqrt.pop %v635
    %v637 = vmul.f32 %v629, %v636
    %v638 = vmul.f32 %v631, %v637
    %v639 = vsub.f32 %v630, %v638
    %v640 = vlaneseq
    %v641 = vshrl.u32 %v640, 7
    %v642 = vsub.s32 0, %v641
    %v643 = vrot.slane %v637, %v642
    %v644 = vmul.f32 %v564, %v643
    %v645 = vlaneseq
    %v646 = vshrl.u32 %v645, 7
    %v647 = vsub.s32 0, %v646
    %v648 = vrot.slane %v639, %v647
    %v649 = vadd.f32 %v644, %v648
    %v650 = vpack.c.bf16 %v649, %v649
    %v651 = vld [vmem:[#allocation12] sm:$0xf]
    %v652 = vld [vmem:[#allocation12 + $0x4] sm:$0xf]
    %v653 = vld [vmem:[#allocation12 + $0x8] sm:$0xf]
    %v654 = vld [vmem:[#allocation12 + $0xc] sm:$0xf]
    %v655 = vld [vmem:[#allocation12 + $0x10] sm:$0xf]
    %v656 = vld [vmem:[#allocation12 + $0x14] sm:$0xf]
    %v657 = vld [vmem:[#allocation12 + $0x18] sm:$0xf]
    %v658 = vld [vmem:[#allocation12 + $0x1c] sm:$0xf]
    %v659 = vld [vmem:[#allocation12 + $0x20] sm:$0xf]
    %v660 = vld [vmem:[#allocation12 + $0x24] sm:$0xf]
    %v661 = vld [vmem:[#allocation12 + $0x28] sm:$0xf]
    %v662 = vld [vmem:[#allocation12 + $0x2c] sm:$0xf]
    %v663 = vld [vmem:[#allocation12 + $0x30] sm:$0xf]
    %v664 = vld [vmem:[#allocation12 + $0x34] sm:$0xf]
    %v665 = vld [vmem:[#allocation12 + $0x38] sm:$0xf]
    %v666 = vld [vmem:[#allocation12 + $0x3c] sm:$0xf]
    %v667 = vld [vmem:[#allocation13 + $0x9] sm:$0x1]
    %v668 = vlaneseq
    %v669 = vshrl.u32 %v668, 7
    %v670 = vsub.s32 0, %v669
    %v671 = vrot.slane %v667, %v670
    %v688 = vunpack.c.l.b16 %v651
    %v689 = vunpack.c.l.b16 %v652
    %v690 = vunpack.c.l.b16 %v653
    %v691 = vunpack.c.l.b16 %v654
    %v692 = vunpack.c.l.b16 %v655
    %v693 = vunpack.c.l.b16 %v656
    %v694 = vunpack.c.l.b16 %v657
    %v695 = vunpack.c.l.b16 %v658
    %v696 = vunpack.c.l.b16 %v659
    %v697 = vunpack.c.l.b16 %v660
    %v698 = vunpack.c.l.b16 %v661
    %v699 = vunpack.c.l.b16 %v662
    %v700 = vunpack.c.l.b16 %v663
    %v701 = vunpack.c.l.b16 %v664
    %v702 = vunpack.c.l.b16 %v665
    %v703 = vunpack.c.l.b16 %v666
    %v704 = vpack.c.b16 %v689, %v688
    %v705 = vpack.c.b16 %v691, %v690
    %v706 = vpack.c.b16 %v693, %v692
    %v707 = vpack.c.b16 %v695, %v694
    %v708 = vpack.c.b16 %v697, %v696
    %v709 = vpack.c.b16 %v699, %v698
    %v710 = vpack.c.b16 %v701, %v700
    %v711 = vpack.c.b16 %v703, %v702
    %720 = vmatprep.subr.bf16.mxu0 0
    %721 = vmatpush1.bf16.msra.mxu0 %v704
    %722 = vmatprep.subr.bf16.mxu0 0
    %723 = vmatpush1.bf16.msra.mxu0 %v705
    %724 = vmatprep.subr.bf16.mxu0 0
    %725 = vmatpush1.bf16.msra.mxu0 %v706
    %726 = vmatprep.subr.bf16.mxu0 0
    %727 = vmatpush1.bf16.msra.mxu0 %v707
    %728 = vmatprep.subr.bf16.mxu0 0
    %729 = vmatpush1.bf16.msra.mxu0 %v708
    %730 = vmatprep.subr.bf16.mxu0 0
    %731 = vmatpush1.bf16.msra.mxu0 %v709
    %732 = vmatprep.subr.bf16.mxu0 0
    %733 = vmatpush1.bf16.msra.mxu0 %v710
    %734 = vmatprep.subr.bf16.mxu0 0
    %735 = vmatpush1.bf16.msra.mxu0 %v711
    %736 = vmatprep.subr.bf16.mxu0 0
    %737 = vmatpush1.bf16.msra.mxu0 0
    %738 = vmatprep.subr.bf16.mxu0 0
    %739 = vmatpush1.bf16.msra.mxu0 0
    %740 = vmatprep.subr.bf16.mxu0 0
    %741 = vmatpush1.bf16.msra.mxu0 0
    %742 = vmatprep.subr.bf16.mxu0 0
    %743 = vmatpush1.bf16.msra.mxu0 0
    %744 = vmatprep.subr.bf16.mxu0 0
    %745 = vmatpush1.bf16.msra.mxu0 0
    %746 = vmatprep.subr.bf16.mxu0 0
    %747 = vmatpush1.bf16.msra.mxu0 0
    %748 = vmatprep.subr.bf16.mxu0 0
    %749 = vmatpush1.bf16.msra.mxu0 0
    %750 = vmatprep.subr.bf16.mxu0 0
    %751 = vmatpush1.bf16.msra.mxu0 0
    %752 = vmatprep.mubr.bf16.mxu0 0
    %753 = vmatmul.mubr.bf16.gmra.mrb[0].mxu0 %v650
    %v754 = vpop.f32.mrb[0].mxu0
    %v755 = vadd.f32 %v671, %v754
    %v756 = vpop.f32.mrb[0].mxu0
    %v757 = vpop.f32.mrb[0].mxu0
    %v758 = vpop.f32.mrb[0].mxu0
    %759 = vdwg.mxu0
    %760 = vst [vmem:[#allocation15] sm:$0xff] %v755
    // Predicated region
    $region38: #{tpu_custom_call.1} parent=1 // pred_check
      _
    $region39: #{tpu_custom_call.1} parent=1 // pred_check_branch
      %762 = sbr.rel (0) target = $region41
    $region40: #{tpu_custom_call.1} parent=1 // pred_region
      %s764 = ssub.s32 128, 128
      %765 = vsyncadd [#allocation9], %s764
      %s767 = sshll.u32 [#allocation15], 4
      %s768 = int_to_ptr.vmem [resolvable:$true] %s767
      %770 = dma.vmem_to_hbm [thread:$0]  %s768, 128, %s5, [#allocation9]
    $region41: #{tpu_custom_call.1} parent=1 // pred_fallthru
      _
    // Predicated region
    $region42: #{tpu_custom_call.1} parent=1 // pred_check
      _
    $region43: #{tpu_custom_call.1} parent=1 // pred_check_branch
      %772 = sbr.rel (0) target = $region45
    $region44: #{tpu_custom_call.1} parent=1 // pred_region
      %773 = dma.done [#allocation9], 128
    $region45: #{tpu_custom_call.1} parent=1 // pred_fallthru
      _
    %774 = vsyncpa [#allocation8], 1
    %775 = vsyncpa [#allocation11], 1
    %776 = vsyncpa [#allocation14], 1
    %777 = vsyncpa [#allocation9], 1
  %778 = vsyncmov [#allocation3]
  %s779 = vpop.sfrf %778
  %p780 = scmp.eq.s32.totalorder %s779, 0
  %p781 = pneg %p780
  %783 = shalt.err (%p781)
  %s784 = scalar_lea.sflag [#allocation3], 1
  %785 = vsyncmov %s784
  %s786 = vpop.sfrf %785
  %p787 = scmp.eq.s32.totalorder %s786, 0
  %p788 = pneg %p787
  %790 = shalt.err (%p788)

</llo_original>
